<compile_context>
chip_gen: v7x
topology: tpu7x:2x2x1
jax: 0.10.0
libtpu: 0.0.40
codegen_flags: <defaults>
</compile_context>

<pallas_src>
import functools

import jax
import jax.numpy as jnp
from jax import lax
from jax.experimental import pallas as pl
from jax.experimental.pallas import tpu as pltpu

_LANE = 128


def _round_up(a, b):
    return -(-a // b) * b


def _vmem_limit_bytes():
    """Generation-aware scoped-VMEM limit (~75% of physical per-core VMEM)."""
    cap = 0
    get_info = getattr(pltpu, "get_tpu_info", None)
    if get_info is not None:
        try:
            cap = int(getattr(get_info(), "vmem_capacity_bytes", 0) or 0)
        except Exception:
            cap = 0
    if cap <= 0:
        cap = 64 * 1024 * 1024  # conservative default: v7x per-TC physical VMEM
    return (cap * 3) // 4


def _choose_blocks(n_rows, hw, itemsize, vmem_limit):
    """Pick (row_block, hw_block, hw_tiled).

    The per-block budget is ~30% of the scoped VMEM limit so the
    double-buffered input pair plus the (tiny) output/scratch fit comfortably.
    Block dims always satisfy the TPU (8, 128)-or-full-extent tiling rule.
    """
    sub = 8 * max(1, 4 // itemsize)          # sublane multiple for this dtype
    hw_padded = _round_up(hw, _LANE)         # lane padding inside VMEM
    per_block = max((vmem_limit * 3) // 10, sub * _LANE * itemsize)

    # Fallback: even `sub` full rows exceed the budget -> tile the H*W axis.
    if sub * hw_padded * itemsize > per_block:
        row_block = n_rows if n_rows < sub else sub
        hw_block = min(hw_padded,
                       max(_LANE, ((per_block // (sub * itemsize)) // _LANE) * _LANE))
        return int(row_block), int(hw_block), True

    rows = per_block // (hw_padded * itemsize)       # rows fitting the budget
    if rows >= n_rows and n_rows < 2 * _LANE:
        # Whole (small) row extent in one full-extent block.
        return int(n_rows), hw, False

    # Keep >= 2 grid blocks when the row extent allows it (v7x has 2 TCs),
    # then round so every block dim is a clean multiple of the tiling.
    half = _round_up(-(-n_rows // 2), sub)
    rows = min(rows, half)
    if rows >= _LANE:
        rows = (rows // _LANE) * _LANE               # lane/sublane friendly
    else:
        rows = max(sub, (rows // sub) * sub)
    return int(rows), hw, False


def _gap_kernel(x_ref, o_ref, *, inv_hw):
    # x_ref: (row_block, H*W) lane-dense block; o_ref: (row_block, 1).
    # Widen-to-f32 is fused into the reduction; mean via constant multiply.
    s = jnp.sum(x_ref[...], axis=-1, keepdims=True, dtype=jnp.float32)
    o_ref[...] = (s * inv_hw).astype(o_ref.dtype)


def _gap_kernel_hw_tiled(x_ref, o_ref, acc_ref, *, inv_hw, hw, hw_block, need_mask):
    # 2-D grid: (row blocks "parallel", hw blocks "arbitrary").  acc_ref is an
    # f32 (row_block, 1) partial-sum accumulator living across the hw axis.
    k = pl.program_id(1)

    @pl.when(k == 0)
    def _():
        acc_ref[...] = jnp.zeros_like(acc_ref)

    xb = x_ref[...]
    if need_mask:
        # Ragged last hw block: zero out the out-of-range lanes before summing.
        col = k * hw_block + lax.broadcasted_iota(jnp.int32, xb.shape, 1)
        xb = jnp.where(col < hw, xb, jnp.zeros_like(xb))
    acc_ref[...] += jnp.sum(xb, axis=-1, keepdims=True, dtype=jnp.float32)

    @pl.when(k == pl.num_programs(1) - 1)
    def _():
        o_ref[...] = (acc_ref[...] * inv_hw).astype(o_ref.dtype)


def global_avg_pool2d(x):
    """Pallas TPU equivalent of F.avg_pool2d(x, kernel_size=x.shape[2:])."""
    N, C, H, W = x.shape
    HW = int(H) * int(W)
    R = int(N) * int(C)
    inv_hw = 1.0 / float(HW)                 # compile-time Python constant

    # Lane-dense flattened view: rows are (n, c) pairs, lanes are H*W.
    x2 = x.reshape(R, HW)

    vmem_limit = _vmem_limit_bytes()
    row_block, hw_block, hw_tiled = _choose_blocks(R, HW, x.dtype.itemsize, vmem_limit)

    if not hw_tiled:
        num_blocks = -(-R // row_block)      # ceil-div; boundary block handled
        out = pl.pallas_call(
            functools.partial(_gap_kernel, inv_hw=inv_hw),
            out_shape=jax.ShapeDtypeStruct((R, 1), x.dtype),
            grid_spec=pltpu.PrefetchScalarGridSpec(
                num_scalar_prefetch=0,
                grid=(num_blocks,),
                in_specs=[
                    # (row_block, H*W): last dim is the full array extent,
                    # second-to-last is a sublane multiple (or full extent).
                    pl.BlockSpec((row_block, HW), lambda i: (i, 0)),
                ],
                # Per-row means, one per sublane; OOB rows of the last block
                # are dropped by the masked writeback.
                out_specs=pl.BlockSpec((row_block, 1), lambda i: (i, 0)),
            ),
            compiler_params=pltpu.CompilerParams(
                dimension_semantics=("parallel",),   # megacore / 2-TC sharding
                vmem_limit_bytes=vmem_limit,
            ),
        )(x2)
    else:
        # Very large spatial extent: tile H*W and accumulate partial sums.
        num_row_blocks = -(-R // row_block)
        num_hw_blocks = -(-HW // hw_block)
        need_mask = (HW % hw_block) != 0
        out = pl.pallas_call(
            functools.partial(_gap_kernel_hw_tiled, inv_hw=inv_hw, hw=HW,
                              hw_block=hw_block, need_mask=need_mask),
            out_shape=jax.ShapeDtypeStruct((R, 1), x.dtype),
            grid_spec=pltpu.PrefetchScalarGridSpec(
                num_scalar_prefetch=0,
                grid=(num_row_blocks, num_hw_blocks),
                in_specs=[pl.BlockSpec((row_block, hw_block), lambda i, k: (i, k))],
                out_specs=pl.BlockSpec((row_block, 1), lambda i, k: (i, 0)),
                scratch_shapes=[pltpu.VMEM((row_block, 1), jnp.float32)],
            ),
            compiler_params=pltpu.CompilerParams(
                dimension_semantics=("parallel", "arbitrary"),
                vmem_limit_bytes=vmem_limit,
            ),
        )(x2)

    # Restore the (N, C, 1, 1) NCHW output layout.
    return out.reshape(N, C, 1, 1)


if __name__ == "__main__":
    key = jax.random.PRNGKey(0)
    # NCHW image-like input, small shapes consistent with the module.
    x = jax.random.normal(key, (2, 4, 16, 16), dtype=jnp.float32)

    out = global_avg_pool2d(x)
    out = jax.block_until_ready(out)

    # Reference check against plain JAX mean over spatial dims.
    ref = jnp.mean(x, axis=(2, 3), keepdims=True)
    assert out.shape == (2, 4, 1, 1), out.shape
    assert jnp.allclose(out, ref, atol=1e-5, rtol=1e-5)

    print("KERNEL_OK")
</pallas_src>

<mosaic_0001>
module attributes {stable_mosaic.version = 11 : i64} {
  func.func @_gap_kernel(%arg0: i32, %arg1: memref<8x256xf32, #tpu.memory_space<vmem>>, %arg2: memref<8x1xf32, #tpu.memory_space<vmem>>) attributes {dimension_semantics = [#tpu.dimension_semantics<parallel>], iteration_bounds = array<i64: 1>, scalar_prefetch = 0 : i64, scratch_operands = 0 : i64, tpu.core_type = #tpu.core_type<tc>, window_params = [{transform_indices = @transform_0, window_bounds = array<i64: 8, 256>}, {transform_indices = @transform_1, window_bounds = array<i64: 8, 1>}]} {
    %c0 = arith.constant 0 : index
    %c0_0 = arith.constant 0 : index
    %0 = vector.load %arg1[%c0, %c0_0] : memref<8x256xf32, #tpu.memory_space<vmem>>, vector<8x256xf32>
    %cst = arith.constant dense<0.000000e+00> : vector<8xf32>
    %1 = vector.multi_reduction <add>, %0, %cst [1] : vector<8x256xf32> to vector<8xf32>
    %2 = vector.shape_cast %1 : vector<8xf32> to vector<8x1xf32>
    %cst_1 = arith.constant 3.906250e-03 : f32
    %3 = vector.broadcast %cst_1 : f32 to vector<8x1xf32>
    %4 = arith.mulf %2, %3 : vector<8x1xf32>
    %c0_2 = arith.constant 0 : index
    %c0_3 = arith.constant 0 : index
    %5 = vector.load %arg2[%c0_2, %c0_3] : memref<8x1xf32, #tpu.memory_space<vmem>>, vector<8x1xf32>
    tpu.vector_store %arg2[%c0_2, %c0_3], %4 {strides = array<i32>} : memref<8x1xf32, #tpu.memory_space<vmem>>, vector<8x1xf32>,
    return
  }
  func.func @transform_0(%arg0: i32) -> (i32, i32) {
    %c0_i32 = arith.constant 0 : i32
    %c0_i32_0 = arith.constant 0 : i32
    return %arg0, %c0_i32 : i32, i32
  }
  func.func @transform_1(%arg0: i32) -> (i32, i32) {
    %c0_i32 = arith.constant 0 : i32
    %c0_i32_0 = arith.constant 0 : i32
    return %arg0, %c0_i32 : i32, i32
  }
}

</mosaic_0001>

<llo_original>
// kernel: tpu_custom_call.1
$region0: #{tpu_custom_call.1}
  #allocation0 [shape = 'u32[]', space=smem, size = 0x4, offset = 0x4, fixed_abs, tag = 'smem constant byte address 0x4 - core index']
  #allocation1 [shape = 'u32[144,128]{1,0:T(1,128)}', space=vmem, size = 0x12000, scoped, tag = 'internal scratch']
  %s0 = inlined_call_operand.hbm [shape: f32[8,256], index: 0, kind: input, shape index: {}]
  %s1 = inlined_call_operand.vmem [shape: f32[8,1], index: 1, kind: output, shape index: {}]
  %s2 = sld [smem:[#allocation0]]
  $region18: #{tpu_custom_call.1} parent=0
    _
  %s4 = ssub.s32 1, %s2
  %s5 = scalar_select 0, %s4, %s2
  $region1: #{tpu_custom_call.1} parent=0
    #allocation2 [shape = 'u8[8192]{0}', space=vmem, size = 0x2000, scoped, tag = 'input window, operand 0, single buffered']
    #allocation3 [shape = 's32[1]{0}', space=sflag, size = 0x4, scoped, tag = 'scoped memory for tpu_custom_call.1']
    %6 = vsyncpa [#allocation3], 0
    // Predicated region
    $region2: #{tpu_custom_call.1} parent=1 // pred_check
      _
    $region3: #{tpu_custom_call.1} parent=1 // pred_check_branch
      %8 = sbr.rel (0) target = $region5
    $region4: #{tpu_custom_call.1} parent=1 // pred_region
      %s10 = ssub.s32 256, 256
      %11 = vsyncadd [#allocation3], %s10
      %s13 = sshll.u32 [#allocation2], 4
      %s14 = int_to_ptr.vmem [resolvable:$true] %s13
      %16 = dma.hbm_to_vmem [thread:$0]  %s0, 256, %s14, [#allocation3]
    $region5: #{tpu_custom_call.1} parent=1 // pred_fallthru
      _
    // Predicated region
    $region6: #{tpu_custom_call.1} parent=1 // pred_check
      _
    $region7: #{tpu_custom_call.1} parent=1 // pred_check_branch
      %18 = sbr.rel (0) target = $region9
    $region8: #{tpu_custom_call.1} parent=1 // pred_region
      %19 = dma.done [#allocation3], 256
    $region9: #{tpu_custom_call.1} parent=1 // pred_fallthru
      _
    %v20 = vld [vmem:[#allocation2] sm:$0xff]
    %v21 = vld [vmem:[#allocation2 + $0x8] sm:$0xff]
    %v22 = vadd.f32 %v20, %v21
    %23 = vadd.xlane.f32.xlu0 %v22
    %v24 = vpop.xlane.xlu0 %23
    %v25 = vmul.f32 %v24, 0.00390625
    %vm26 = vcmask 7168
    %27 = vst.msk [vmem:[%s1] sm:$0xff] %vm26, %v25
    // Predicated region
    $region10: #{tpu_custom_call.1} parent=1 // pred_check
      _
    $region11: #{tpu_custom_call.1} parent=1 // pred_check_branch
      %29 = sbr.rel (0) target = $region13
    $region12: #{tpu_custom_call.1} parent=1 // pred_region
      _
    $region13: #{tpu_custom_call.1} parent=1 // pred_fallthru
      _
    // Predicated region
    $region14: #{tpu_custom_call.1} parent=1 // pred_check
      _
    $region15: #{tpu_custom_call.1} parent=1 // pred_check_branch
      %31 = sbr.rel (0) target = $region17
    $region16: #{tpu_custom_call.1} parent=1 // pred_region
      _
    $region17: #{tpu_custom_call.1} parent=1 // pred_fallthru
      _
    %32 = vsyncpa [#allocation3], 1

</llo_original>
